<compile_context>
chip_gen: v7x
topology: tpu7x:2x2x1
jax: 0.10.0
libtpu: 0.0.40
codegen_flags: <defaults>
</compile_context>

<pallas_src>
import functools

import jax
import jax.numpy as jnp
from jax.experimental import pallas as pl
from jax.experimental.pallas import tpu as pltpu

_LANE = 128
_SUBLANE = 8


def _round_up(n, m):
    return ((n + m - 1) // m) * m


def _num_tensorcores():
    """Best-effort TensorCore count of the first local device (v7x has 2)."""
    try:
        dev = jax.devices()[0]
        for attr in ("num_cores", "core_count"):
            n = getattr(dev, attr, None)
            if isinstance(n, int) and n > 0:
                return n
    except Exception:
        pass
    return 1


def _pick_block_m(batch, num_cores):
    b_r = _round_up(batch, _SUBLANE)
    if num_cores > 1:
        # >= 2 grid steps so the "parallel" batch axis shards across TCs.
        blk = _round_up(pl.cdiv(b_r, 2 * num_cores), _SUBLANE)
        return max(_SUBLANE, min(blk, 1024))
    # Single TC (v5e/v6e): one big tile per step amortizes the ~0.35us/step
    # overhead; 1024 rows keeps VMEM a few MiB, far under the scoped default.
    return min(b_r, 1024)


def _mlp_kernel(x_ref, w1_ref, b1_ref, w2_ref, b2_ref, w3_ref, b3_ref, o_ref):
    # Layer 1: in-kernel VPU cast of x to bf16 (free under the DMA bottleneck),
    # bf16 MXU operands, f32 accumulation; bias-add + ReLU in f32 on the VPU.
    h = jnp.dot(x_ref[...].astype(jnp.bfloat16), w1_ref[...],
                preferred_element_type=jnp.float32)
    h = jnp.maximum(h + b1_ref[...], 0.0)
    # Layer 2.
    h = jnp.dot(h.astype(jnp.bfloat16), w2_ref[...],
                preferred_element_type=jnp.float32)
    h = jnp.maximum(h + b2_ref[...], 0.0)
    # Layer 3 (no activation after the last layer).
    h = jnp.dot(h.astype(jnp.bfloat16), w3_ref[...],
                preferred_element_type=jnp.float32)
    o_ref[...] = (h + b3_ref[...]).astype(o_ref.dtype)


def prepare_params(w1, b1, w2, b2, w3, b3):
    """One-time param prep: pad matmul K/N dims to lane multiples, cast
    weights to bf16 (MXU operands). Padded entries are zero so padded hidden
    columns stay exactly zero through bias+ReLU. Output dim is NOT padded
    (64 is emitted at true width). Call once; reuse the result every call."""
    d_in, h1 = w1.shape
    h2 = w2.shape[1]
    d_out = w3.shape[1]
    d_in_p = _round_up(d_in, _LANE)
    h1_p = _round_up(h1, _LANE)
    h2_p = _round_up(h2, _LANE)

    def pad2(a, rows, cols):
        return jnp.pad(a, ((0, rows - a.shape[0]), (0, cols - a.shape[1])))

    w1_p = pad2(w1, d_in_p, h1_p).astype(jnp.bfloat16)
    w2_p = pad2(w2, h1_p, h2_p).astype(jnp.bfloat16)
    w3_p = pad2(w3, h2_p, d_out).astype(jnp.bfloat16)
    b1_p = pad2(b1, 1, h1_p)            # biases stay f32 for the VPU add/ReLU
    b2_p = pad2(b2, 1, h2_p)
    b3_p = b3
    return (w1_p, b1_p, w2_p, b2_p, w3_p, b3_p)


@functools.partial(jax.jit, static_argnames=("block_m",))
def _feature_align_net_impl(x, w1, b1, w2, b2, w3, b3, *, block_m):
    B, d_in = x.shape
    d_in_p, h1_p = w1.shape
    h2_p = w2.shape[1]
    d_out = w3.shape[1]
    assert d_in == d_in_p, "prepare_params assumes d_in is a multiple of 128"

    # Only batch rows need padding (d_in is already lane-aligned, x stays f32).
    B_p = _round_up(B, block_m)
    if B_p != B:
        x = jnp.pad(x, ((0, B_p - B), (0, 0)))
    grid = (B_p // block_m,)

    # Grid-invariant specs: constant index_map -> fetched once, kept resident.
    full = lambda shape: pl.BlockSpec(shape, lambda i: (0, 0))

    flops = 2 * B_p * (d_in_p * h1_p + h1_p * h2_p + h2_p * d_out)
    bytes_accessed = (
        B_p * d_in_p * 4                                  # x (f32 in)
        + (d_in_p * h1_p + h1_p * h2_p + h2_p * d_out) * 2  # bf16 weights
        + (h1_p + h2_p + d_out) * 4                       # f32 biases
        + B_p * d_out * 4                                 # f32 out
    )

    out = pl.pallas_call(
        _mlp_kernel,
        out_shape=jax.ShapeDtypeStruct((B_p, d_out), jnp.float32),
        grid_spec=pltpu.PrefetchScalarGridSpec(
            num_scalar_prefetch=0,
            grid=grid,
            in_specs=[
                pl.BlockSpec((block_m, d_in_p), lambda i: (i, 0)),  # x tile
                full((d_in_p, h1_p)),   # w1
                full((1, h1_p)),        # b1
                full((h1_p, h2_p)),     # w2
                full((1, h2_p)),        # b2
                full((h2_p, d_out)),    # w3 (true 64-wide N)
                full((1, d_out)),       # b3
            ],
            out_specs=pl.BlockSpec((block_m, d_out), lambda i: (i, 0)),
        ),
        compiler_params=pltpu.CompilerParams(
            dimension_semantics=("parallel",),
        ),
        cost_estimate=pl.CostEstimate(
            flops=flops, transcendentals=0, bytes_accessed=bytes_accessed),
    )(x, w1, b1, w2, b2, w3, b3)

    return out[:B, :] if B_p != B else out


def feature_align_net(x, params, *, block_m=None):
    """Fused 3-layer MLP forward pass.

    x      : (B, D_in) float32
    params : output of prepare_params() (padded bf16 weights, f32 biases)
    returns (B, D_out) float32
    """
    if block_m is None:
        block_m = _pick_block_m(x.shape[0], _num_tensorcores())
    return _feature_align_net_impl(x, *params, block_m=block_m)


def _init_params(key, d_in, h, d_out):
    """Deterministic synthetic init (uniform, Kaiming-like scale)."""
    ks = jax.random.split(key, 6)

    def lin(kw, kb, fan_in, fan_out):
        bound = 1.0 / jnp.sqrt(fan_in)
        w = jax.random.uniform(kw, (fan_in, fan_out), jnp.float32, -bound, bound)
        b = jax.random.uniform(kb, (1, fan_out), jnp.float32, -bound, bound)
        return w, b

    w1, b1 = lin(ks[0], ks[1], d_in, h)
    w2, b2 = lin(ks[2], ks[3], h, h)
    w3, b3 = lin(ks[4], ks[5], h, d_out)
    return w1, b1, w2, b2, w3, b3


def _reference(x, w1, b1, w2, b2, w3, b3):
    h = jnp.maximum(x @ w1 + b1, 0.0)
    h = jnp.maximum(h @ w2 + b2, 0.0)
    return h @ w3 + b3


if __name__ == "__main__":
    key = jax.random.PRNGKey(0)
    k_x, k_p = jax.random.split(key)

    B, D_IN, HIDDEN, D_OUT = 16, 256, 64, 64   # module config described above
    x = jax.random.normal(k_x, (B, D_IN), dtype=jnp.float32)
    raw_params = _init_params(k_p, D_IN, HIDDEN, D_OUT)

    # One-time param prep (padding + bf16 cast hoisted out of the call path).
    params = jax.block_until_ready(prepare_params(*raw_params))

    out = feature_align_net(x, params)
    out = jax.block_until_ready(out)

    ref = _reference(x, *raw_params)  # f32 reference
    assert out.shape == (B, D_OUT)
    # bf16 MXU operands (f32 accumulation) -> expect ~1e-2-level relative error.
    assert jnp.allclose(out, ref, atol=5e-2, rtol=5e-2), "mismatch vs reference"

    print("KERNEL_OK")
</pallas_src>

<mosaic_0001>
module attributes {stable_mosaic.version = 11 : i64} {
  func.func @_mlp_kernel(%arg0: i32, %arg1: memref<16x256xf32, #tpu.memory_space<vmem>>, %arg2: memref<256x128xbf16, #tpu.memory_space<vmem>>, %arg3: memref<1x128xf32, #tpu.memory_space<vmem>>, %arg4: memref<128x128xbf16, #tpu.memory_space<vmem>>, %arg5: memref<1x128xf32, #tpu.memory_space<vmem>>, %arg6: memref<128x64xbf16, #tpu.memory_space<vmem>>, %arg7: memref<1x64xf32, #tpu.memory_space<vmem>>, %arg8: memref<16x64xf32, #tpu.memory_space<vmem>>) attributes {dimension_semantics = [#tpu.dimension_semantics<parallel>], iteration_bounds = array<i64: 1>, scalar_prefetch = 0 : i64, scratch_operands = 0 : i64, tpu.core_type = #tpu.core_type<tc>, window_params = [{transform_indices = @transform_0, window_bounds = array<i64: 16, 256>}, {pipeline_mode = #tpu.pipeline_mode<synchronous>, transform_indices = @transform_1, window_bounds = array<i64: 256, 128>}, {pipeline_mode = #tpu.pipeline_mode<synchronous>, transform_indices = @transform_2, window_bounds = array<i64: 1, 128>}, {pipeline_mode = #tpu.pipeline_mode<synchronous>, transform_indices = @transform_3, window_bounds = array<i64: 128, 128>}, {pipeline_mode = #tpu.pipeline_mode<synchronous>, transform_indices = @transform_4, window_bounds = array<i64: 1, 128>}, {pipeline_mode = #tpu.pipeline_mode<synchronous>, transform_indices = @transform_5, window_bounds = array<i64: 128, 64>}, {pipeline_mode = #tpu.pipeline_mode<synchronous>, transform_indices = @transform_6, window_bounds = array<i64: 1, 64>}, {transform_indices = @transform_7, window_bounds = array<i64: 16, 64>}]} {
    %c0 = arith.constant 0 : index
    %c0_0 = arith.constant 0 : index
    %0 = vector.load %arg1[%c0, %c0_0] : memref<16x256xf32, #tpu.memory_space<vmem>>, vector<16x256xf32>
    %1 = arith.truncf %0 : vector<16x256xf32> to vector<16x256xbf16>
    %c0_1 = arith.constant 0 : index
    %c0_2 = arith.constant 0 : index
    %2 = vector.load %arg2[%c0_1, %c0_2] : memref<256x128xbf16, #tpu.memory_space<vmem>>, vector<256x128xbf16>
    %cst = arith.constant dense<0.000000e+00> : vector<16x128xf32>
    %3 = tpu.matmul %1, %2, %cst {dimension_numbers = #tpu.dot_dimension_numbers<[1], [0], [0], [1], [0, 0, 1, 1], [], []>} : vector<16x256xbf16>, vector<256x128xbf16>, vector<16x128xf32> -> vector<16x128xf32>
    %c0_3 = arith.constant 0 : index
    %c0_4 = arith.constant 0 : index
    %4 = vector.load %arg3[%c0_3, %c0_4] : memref<1x128xf32, #tpu.memory_space<vmem>>, vector<1x128xf32>
    %5 = vector.broadcast %4 : vector<1x128xf32> to vector<16x128xf32>
    %6 = arith.addf %3, %5 : vector<16x128xf32>
    %cst_5 = arith.constant 0.000000e+00 : f32
    %7 = vector.broadcast %cst_5 : f32 to vector<16x128xf32>
    %8 = arith.maximumf %6, %7 : vector<16x128xf32>
    %9 = arith.truncf %8 : vector<16x128xf32> to vector<16x128xbf16>
    %c0_6 = arith.constant 0 : index
    %c0_7 = arith.constant 0 : index
    %10 = vector.load %arg4[%c0_6, %c0_7] : memref<128x128xbf16, #tpu.memory_space<vmem>>, vector<128x128xbf16>
    %cst_8 = arith.constant dense<0.000000e+00> : vector<16x128xf32>
    %11 = tpu.matmul %9, %10, %cst_8 {dimension_numbers = #tpu.dot_dimension_numbers<[1], [0], [0], [1], [0, 0, 1, 1], [], []>} : vector<16x128xbf16>, vector<128x128xbf16>, vector<16x128xf32> -> vector<16x128xf32>
    %c0_9 = arith.constant 0 : index
    %c0_10 = arith.constant 0 : index
    %12 = vector.load %arg5[%c0_9, %c0_10] : memref<1x128xf32, #tpu.memory_space<vmem>>, vector<1x128xf32>
    %13 = vector.broadcast %12 : vector<1x128xf32> to vector<16x128xf32>
    %14 = arith.addf %11, %13 : vector<16x128xf32>
    %cst_11 = arith.constant 0.000000e+00 : f32
    %15 = vector.broadcast %cst_11 : f32 to vector<16x128xf32>
    %16 = arith.maximumf %14, %15 : vector<16x128xf32>
    %17 = arith.truncf %16 : vector<16x128xf32> to vector<16x128xbf16>
    %c0_12 = arith.constant 0 : index
    %c0_13 = arith.constant 0 : index
    %18 = vector.load %arg6[%c0_12, %c0_13] : memref<128x64xbf16, #tpu.memory_space<vmem>>, vector<128x64xbf16>
    %cst_14 = arith.constant dense<0.000000e+00> : vector<16x64xf32>
    %19 = tpu.matmul %17, %18, %cst_14 {dimension_numbers = #tpu.dot_dimension_numbers<[1], [0], [0], [1], [0, 0, 1, 1], [], []>} : vector<16x128xbf16>, vector<128x64xbf16>, vector<16x64xf32> -> vector<16x64xf32>
    %c0_15 = arith.constant 0 : index
    %c0_16 = arith.constant 0 : index
    %20 = vector.load %arg7[%c0_15, %c0_16] : memref<1x64xf32, #tpu.memory_space<vmem>>, vector<1x64xf32>
    %21 = vector.broadcast %20 : vector<1x64xf32> to vector<16x64xf32>
    %22 = arith.addf %19, %21 : vector<16x64xf32>
    %c0_17 = arith.constant 0 : index
    %c0_18 = arith.constant 0 : index
    %23 = vector.load %arg8[%c0_17, %c0_18] : memref<16x64xf32, #tpu.memory_space<vmem>>, vector<16x64xf32>
    tpu.vector_store %arg8[%c0_17, %c0_18], %22 {strides = array<i32>} : memref<16x64xf32, #tpu.memory_space<vmem>>, vector<16x64xf32>,
    return
  }
  func.func @transform_0(%arg0: i32) -> (i32, i32) {
    %c0_i32 = arith.constant 0 : i32
    %c0_i32_0 = arith.constant 0 : i32
    return %arg0, %c0_i32 : i32, i32
  }
  func.func @transform_1(%arg0: i32) -> (i32, i32) {
    %c0_i32 = arith.constant 0 : i32
    %c0_i32_0 = arith.constant 0 : i32
    %c0_i32_1 = arith.constant 0 : i32
    return %c0_i32, %c0_i32_0 : i32, i32
  }
  func.func @transform_2(%arg0: i32) -> (i32, i32) {
    %c0_i32 = arith.constant 0 : i32
    %c0_i32_0 = arith.constant 0 : i32
    %c0_i32_1 = arith.constant 0 : i32
    return %c0_i32, %c0_i32_0 : i32, i32
  }
  func.func @transform_3(%arg0: i32) -> (i32, i32) {
    %c0_i32 = arith.constant 0 : i32
    %c0_i32_0 = arith.constant 0 : i32
    %c0_i32_1 = arith.constant 0 : i32
    return %c0_i32, %c0_i32_0 : i32, i32
  }
  func.func @transform_4(%arg0: i32) -> (i32, i32) {
    %c0_i32 = arith.constant 0 : i32
    %c0_i32_0 = arith.constant 0 : i32
    %c0_i32_1 = arith.constant 0 : i32
    return %c0_i32, %c0_i32_0 : i32, i32
  }
  func.func @transform_5(%arg0: i32) -> (i32, i32) {
    %c0_i32 = arith.constant 0 : i32
    %c0_i32_0 = arith.constant 0 : i32
    %c0_i32_1 = arith.constant 0 : i32
    return %c0_i32, %c0_i32_0 : i32, i32
  }
  func.func @transform_6(%arg0: i32) -> (i32, i32) {
    %c0_i32 = arith.constant 0 : i32
    %c0_i32_0 = arith.constant 0 : i32
    %c0_i32_1 = arith.constant 0 : i32
    return %c0_i32, %c0_i32_0 : i32, i32
  }
  func.func @transform_7(%arg0: i32) -> (i32, i32) {
    %c0_i32 = arith.constant 0 : i32
    %c0_i32_0 = arith.constant 0 : i32
    return %arg0, %c0_i32 : i32, i32
  }
}

</mosaic_0001>

<llo_original>
// kernel: _feature_align_net_impl.1
$region0: #{_feature_align_net_impl.1}
  #allocation0 [shape = 'u32[]', space=smem, size = 0x4, offset = 0x4, fixed_abs, tag = 'smem constant byte address 0x4 - core index']
  #allocation1 [shape = 'u32[144,128]{1,0:T(1,128)}', space=vmem, size = 0x12000, scoped, tag = 'internal scratch']
  %s0 = inlined_call_operand.vmem [shape: f32[16,256], index: 0, kind: input, shape index: {}]
  %s1 = inlined_call_operand.hbm [shape: bf16[256,128], index: 1, kind: input, shape index: {}]
  %s2 = inlined_call_operand.vmem [shape: f32[1,128], index: 2, kind: input, shape index: {}]
  %s3 = inlined_call_operand.vmem [shape: bf16[128,128], index: 3, kind: input, shape index: {}]
  %s4 = inlined_call_operand.vmem [shape: f32[1,128], index: 4, kind: input, shape index: {}]
  %s5 = inlined_call_operand.vmem [shape: bf16[128,64], index: 5, kind: input, shape index: {}]
  %s6 = inlined_call_operand.vmem [shape: f32[1,64], index: 6, kind: input, shape index: {}]
  %s7 = inlined_call_operand.hbm [shape: f32[16,64], index: 7, kind: output, shape index: {}]
  %s8 = sld [smem:[#allocation0]]
  $region42: #{_feature_align_net_impl.1} parent=0
    _
  %s10 = ssub.s32 1, %s8
  %s11 = scalar_select 0, %s10, %s8
  $region1: #{_feature_align_net_impl.1} parent=0
    #allocation2 [shape = 'u8[65536]{0}', space=vmem, size = 0x10000, scoped, tag = 'input window, operand 1, single buffered']
    #allocation3 [shape = 's32[1]{0}', space=sflag, size = 0x4, scoped, tag = 'scoped memory for _feature_align_net_impl.1']
    #allocation4 [shape = 's32[1]{0}', space=sflag, size = 0x4, scoped, tag = 'scoped memory for _feature_align_net_impl.1']
    #allocation5 [shape = 'u8[8192]{0}', space=vmem, size = 0x2000, scoped, tag = 'output window, operand 0, single buffered']
    %12 = vsyncpa [#allocation3], 0
    %13 = vsyncpa [#allocation4], 0
    // Predicated region
    $region2: #{_feature_align_net_impl.1} parent=1 // pred_check
      _
    $region3: #{_feature_align_net_impl.1} parent=1 // pred_check_branch
      %15 = sbr.rel (0) target = $region5
    $region4: #{_feature_align_net_impl.1} parent=1 // pred_region
      _
    $region5: #{_feature_align_net_impl.1} parent=1 // pred_fallthru
      _
    // Predicated region
    $region6: #{_feature_align_net_impl.1} parent=1 // pred_check
      _
    $region7: #{_feature_align_net_impl.1} parent=1 // pred_check_branch
      %17 = sbr.rel (0) target = $region9
    $region8: #{_feature_align_net_impl.1} parent=1 // pred_region
      %s19 = ssub.s32 2048, 2048
      %20 = vsyncadd [#allocation3], %s19
      %s21 = sshll.u32 [#allocation2], 4
      %s22 = int_to_ptr.vmem [resolvable:$true] %s21
      %27 = dma.hbm_to_vmem [thread:$0]  %s1, 2048, %s22, [#allocation3], 64, 64, 4
    $region9: #{_feature_align_net_impl.1} parent=1 // pred_fallthru
      _
    // Predicated region
    $region10: #{_feature_align_net_impl.1} parent=1 // pred_check
      _
    $region11: #{_feature_align_net_impl.1} parent=1 // pred_check_branch
      %29 = sbr.rel (0) target = $region13
    $region12: #{_feature_align_net_impl.1} parent=1 // pred_region
      _
    $region13: #{_feature_align_net_impl.1} parent=1 // pred_fallthru
      _
    // Predicated region
    $region14: #{_feature_align_net_impl.1} parent=1 // pred_check
      _
    $region15: #{_feature_align_net_impl.1} parent=1 // pred_check_branch
      %31 = sbr.rel (0) target = $region17
    $region16: #{_feature_align_net_impl.1} parent=1 // pred_region
      _
    $region17: #{_feature_align_net_impl.1} parent=1 // pred_fallthru
      _
    // Predicated region
    $region18: #{_feature_align_net_impl.1} parent=1 // pred_check
      _
    $region19: #{_feature_align_net_impl.1} parent=1 // pred_check_branch
      %33 = sbr.rel (0) target = $region21
    $region20: #{_feature_align_net_impl.1} parent=1 // pred_region
      _
    $region21: #{_feature_align_net_impl.1} parent=1 // pred_fallthru
      _
    // Predicated region
    $region22: #{_feature_align_net_impl.1} parent=1 // pred_check
      _
    $region23: #{_feature_align_net_impl.1} parent=1 // pred_check_branch
      %35 = sbr.rel (0) target = $region25
    $region24: #{_feature_align_net_impl.1} parent=1 // pred_region
      _
    $region25: #{_feature_align_net_impl.1} parent=1 // pred_fallthru
      _
    // Predicated region
    $region26: #{_feature_align_net_impl.1} parent=1 // pred_check
      _
    $region27: #{_feature_align_net_impl.1} parent=1 // pred_check_branch
      %37 = sbr.rel (0) target = $region29
    $region28: #{_feature_align_net_impl.1} parent=1 // pred_region
      _
    $region29: #{_feature_align_net_impl.1} parent=1 // pred_fallthru
      _
    // Predicated region
    $region30: #{_feature_align_net_impl.1} parent=1 // pred_check
      _
    $region31: #{_feature_align_net_impl.1} parent=1 // pred_check_branch
      %39 = sbr.rel (0) target = $region33
    $region32: #{_feature_align_net_impl.1} parent=1 // pred_region
      %40 = dma.done [#allocation3], 2048
    $region33: #{_feature_align_net_impl.1} parent=1 // pred_fallthru
      _
    %v42 = vld [vmem:[%s0] sm:$0xff]
    %v43 = vld [vmem:[%s0 + $0x8] sm:$0xff]
    %v44 = vld [vmem:[%s0 + $0x10] sm:$0xff]
    %v45 = vld [vmem:[%s0 + $0x18] sm:$0xff]
    %v46 = vpack.c.bf16 %v44, %v42
    %v47 = vpack.c.bf16 %v45, %v43
    %v48 = vld [vmem:[#allocation2] sm:$0xf]
    %v49 = vld [vmem:[#allocation2 + $0x4] sm:$0xf]
    %v50 = vld [vmem:[#allocation2 + $0x8] sm:$0xf]
    %v51 = vld [vmem:[#allocation2 + $0xc] sm:$0xf]
    %v52 = vld [vmem:[#allocation2 + $0x10] sm:$0xf]
    %v53 = vld [vmem:[#allocation2 + $0x14] sm:$0xf]
    %v54 = vld [vmem:[#allocation2 + $0x18] sm:$0xf]
    %v55 = vld [vmem:[#allocation2 + $0x1c] sm:$0xf]
    %v56 = vld [vmem:[#allocation2 + $0x20] sm:$0xf]
    %v57 = vld [vmem:[#allocation2 + $0x24] sm:$0xf]
    %v58 = vld [vmem:[#allocation2 + $0x28] sm:$0xf]
    %v59 = vld [vmem:[#allocation2 + $0x2c] sm:$0xf]
    %v60 = vld [vmem:[#allocation2 + $0x30] sm:$0xf]
    %v61 = vld [vmem:[#allocation2 + $0x34] sm:$0xf]
    %v62 = vld [vmem:[#allocation2 + $0x38] sm:$0xf]
    %v63 = vld [vmem:[#allocation2 + $0x3c] sm:$0xf]
    %v64 = vld [vmem:[#allocation2 + $0x40] sm:$0xf]
    %v65 = vld [vmem:[#allocation2 + $0x44] sm:$0xf]
    %v66 = vld [vmem:[#allocation2 + $0x48] sm:$0xf]
    %v67 = vld [vmem:[#allocation2 + $0x4c] sm:$0xf]
    %v68 = vld [vmem:[#allocation2 + $0x50] sm:$0xf]
    %v69 = vld [vmem:[#allocation2 + $0x54] sm:$0xf]
    %v70 = vld [vmem:[#allocation2 + $0x58] sm:$0xf]
    %v71 = vld [vmem:[#allocation2 + $0x5c] sm:$0xf]
    %v72 = vld [vmem:[#allocation2 + $0x60] sm:$0xf]
    %v73 = vld [vmem:[#allocation2 + $0x64] sm:$0xf]
    %v74 = vld [vmem:[#allocation2 + $0x68] sm:$0xf]
    %v75 = vld [vmem:[#allocation2 + $0x6c] sm:$0xf]
    %v76 = vld [vmem:[#allocation2 + $0x70] sm:$0xf]
    %v77 = vld [vmem:[#allocation2 + $0x74] sm:$0xf]
    %v78 = vld [vmem:[#allocation2 + $0x78] sm:$0xf]
    %v79 = vld [vmem:[#allocation2 + $0x7c] sm:$0xf]
    %v80 = vld [vmem:[%s2] sm:$0x1]
    %v82 = vlaneseq
    %v83 = vshrl.u32 %v82, 7
    %v84 = vsub.s32 0, %v83
    %v85 = vrot.slane %v80, %v84
    %v119 = vunpack.c.l.b16 %v48
    %v120 = vunpack.c.l.b16 %v49
    %v121 = vunpack.c.l.b16 %v50
    %v122 = vunpack.c.l.b16 %v51
    %v123 = vunpack.c.l.b16 %v52
    %v124 = vunpack.c.l.b16 %v53
    %v125 = vunpack.c.l.b16 %v54
    %v126 = vunpack.c.l.b16 %v55
    %v127 = vunpack.c.l.b16 %v56
    %v128 = vunpack.c.l.b16 %v57
    %v129 = vunpack.c.l.b16 %v58
    %v130 = vunpack.c.l.b16 %v59
    %v131 = vunpack.c.l.b16 %v60
    %v132 = vunpack.c.l.b16 %v61
    %v133 = vunpack.c.l.b16 %v62
    %v134 = vunpack.c.l.b16 %v63
    %v135 = vunpack.c.l.b16 %v64
    %v136 = vunpack.c.l.b16 %v65
    %v137 = vunpack.c.l.b16 %v66
    %v138 = vunpack.c.l.b16 %v67
    %v139 = vunpack.c.l.b16 %v68
    %v140 = vunpack.c.l.b16 %v69
    %v141 = vunpack.c.l.b16 %v70
    %v142 = vunpack.c.l.b16 %v71
    %v143 = vunpack.c.l.b16 %v72
    %v144 = vunpack.c.l.b16 %v73
    %v145 = vunpack.c.l.b16 %v74
    %v146 = vunpack.c.l.b16 %v75
    %v147 = vunpack.c.l.b16 %v76
    %v148 = vunpack.c.l.b16 %v77
    %v149 = vunpack.c.l.b16 %v78
    %v150 = vunpack.c.l.b16 %v79
    %v151 = vpack.c.b16 %v120, %v119
    %v152 = vpack.c.b16 %v122, %v121
    %v153 = vpack.c.b16 %v124, %v123
    %v154 = vpack.c.b16 %v126, %v125
    %v155 = vpack.c.b16 %v128, %v127
    %v156 = vpack.c.b16 %v130, %v129
    %v157 = vpack.c.b16 %v132, %v131
    %v158 = vpack.c.b16 %v134, %v133
    %v159 = vpack.c.b16 %v136, %v135
    %v160 = vpack.c.b16 %v138, %v137
    %v161 = vpack.c.b16 %v140, %v139
    %v162 = vpack.c.b16 %v142, %v141
    %v163 = vpack.c.b16 %v144, %v143
    %v164 = vpack.c.b16 %v146, %v145
    %v165 = vpack.c.b16 %v148, %v147
    %v166 = vpack.c.b16 %v150, %v149
    %183 = vmatprep.subr.bf16.mxu0 0
    %184 = vmatpush1.bf16.msra.mxu0 %v151
    %185 = vmatprep.subr.bf16.mxu0 0
    %186 = vmatpush1.bf16.msra.mxu0 %v152
    %187 = vmatprep.subr.bf16.mxu0 0
    %188 = vmatpush1.bf16.msra.mxu0 %v153
    %189 = vmatprep.subr.bf16.mxu0 0
    %190 = vmatpush1.bf16.msra.mxu0 %v154
    %191 = vmatprep.subr.bf16.mxu0 0
    %192 = vmatpush1.bf16.msra.mxu0 %v155
    %193 = vmatprep.subr.bf16.mxu0 0
    %194 = vmatpush1.bf16.msra.mxu0 %v156
    %195 = vmatprep.subr.bf16.mxu0 0
    %196 = vmatpush1.bf16.msra.mxu0 %v157
    %197 = vmatprep.subr.bf16.mxu0 0
    %198 = vmatpush1.bf16.msra.mxu0 %v158
    %199 = vmatprep.subr.bf16.mxu0 0
    %200 = vmatpush1.bf16.msra.mxu0 %v159
    %201 = vmatprep.subr.bf16.mxu0 0
    %202 = vmatpush1.bf16.msra.mxu0 %v160
    %203 = vmatprep.subr.bf16.mxu0 0
    %204 = vmatpush1.bf16.msra.mxu0 %v161
    %205 = vmatprep.subr.bf16.mxu0 0
    %206 = vmatpush1.bf16.msra.mxu0 %v162
    %207 = vmatprep.subr.bf16.mxu0 0
    %208 = vmatpush1.bf16.msra.mxu0 %v163
    %209 = vmatprep.subr.bf16.mxu0 0
    %210 = vmatpush1.bf16.msra.mxu0 %v164
    %211 = vmatprep.subr.bf16.mxu0 0
    %212 = vmatpush1.bf16.msra.mxu0 %v165
    %213 = vmatprep.subr.bf16.mxu0 0
    %214 = vmatpush1.bf16.msra.mxu0 %v166
    %215 = vmatprep.mubr.bf16.mxu0 %v47
    %216 = vmatmul.mubr.bf16.gmra.mrb[0].mxu0 %v46
    %v217 = vpop.f32.mrb[0].mxu0
    %v218 = vadd.f32 %v85, %v217
    %v219 = vpop.f32.mrb[0].mxu0
    %v220 = vpop.f32.mrb[0].mxu0
    %v221 = vadd.f32 %v85, %v220
    %v222 = vpop.f32.mrb[0].mxu0
    %223 = vdwg.mxu0
    %v224 = vmax.f32 %v218, 0.0
    %v225 = vmax.f32 %v221, 0.0
    %v226 = vpack.c.bf16 %v225, %v224
    %v227 = vld [vmem:[%s3] sm:$0xf]
    %v228 = vld [vmem:[%s3 + $0x4] sm:$0xf]
    %v229 = vld [vmem:[%s3 + $0x8] sm:$0xf]
    %v230 = vld [vmem:[%s3 + $0xc] sm:$0xf]
    %v231 = vld [vmem:[%s3 + $0x10] sm:$0xf]
    %v232 = vld [vmem:[%s3 + $0x14] sm:$0xf]
    %v233 = vld [vmem:[%s3 + $0x18] sm:$0xf]
    %v234 = vld [vmem:[%s3 + $0x1c] sm:$0xf]
    %v235 = vld [vmem:[%s3 + $0x20] sm:$0xf]
    %v236 = vld [vmem:[%s3 + $0x24] sm:$0xf]
    %v237 = vld [vmem:[%s3 + $0x28] sm:$0xf]
    %v238 = vld [vmem:[%s3 + $0x2c] sm:$0xf]
    %v239 = vld [vmem:[%s3 + $0x30] sm:$0xf]
    %v240 = vld [vmem:[%s3 + $0x34] sm:$0xf]
    %v241 = vld [vmem:[%s3 + $0x38] sm:$0xf]
    %v242 = vld [vmem:[%s3 + $0x3c] sm:$0xf]
    %v243 = vld [vmem:[%s4] sm:$0x1]
    %v245 = vlaneseq
    %v246 = vshrl.u32 %v245, 7
    %v247 = vsub.s32 0, %v246
    %v248 = vrot.slane %v243, %v247
    %v266 = vunpack.c.l.b16 %v227
    %v267 = vunpack.c.l.b16 %v228
    %v268 = vunpack.c.l.b16 %v229
    %v269 = vunpack.c.l.b16 %v230
    %v270 = vunpack.c.l.b16 %v231
    %v271 = vunpack.c.l.b16 %v232
    %v272 = vunpack.c.l.b16 %v233
    %v273 = vunpack.c.l.b16 %v234
    %v274 = vunpack.c.l.b16 %v235
    %v275 = vunpack.c.l.b16 %v236
    %v276 = vunpack.c.l.b16 %v237
    %v277 = vunpack.c.l.b16 %v238
    %v278 = vunpack.c.l.b16 %v239
    %v279 = vunpack.c.l.b16 %v240
    %v280 = vunpack.c.l.b16 %v241
    %v281 = vunpack.c.l.b16 %v242
    %v282 = vpack.c.b16 %v267, %v266
    %v283 = vpack.c.b16 %v269, %v268
    %v284 = vpack.c.b16 %v271, %v270
    %v285 = vpack.c.b16 %v273, %v272
    %v286 = vpack.c.b16 %v275, %v274
    %v287 = vpack.c.b16 %v277, %v276
    %v288 = vpack.c.b16 %v279, %v278
    %v289 = vpack.c.b16 %v281, %v280
    %298 = vmatprep.subr.bf16.mxu0 0
    %299 = vmatpush1.bf16.msra.mxu0 %v282
    %300 = vmatprep.subr.bf16.mxu0 0
    %301 = vmatpush1.bf16.msra.mxu0 %v283
    %302 = vmatprep.subr.bf16.mxu0 0
    %303 = vmatpush1.bf16.msra.mxu0 %v284
    %304 = vmatprep.subr.bf16.mxu0 0
    %305 = vmatpush1.bf16.msra.mxu0 %v285
    %306 = vmatprep.subr.bf16.mxu0 0
    %307 = vmatpush1.bf16.msra.mxu0 %v286
    %308 = vmatprep.subr.bf16.mxu0 0
    %309 = vmatpush1.bf16.msra.mxu0 %v287
    %310 = vmatprep.subr.bf16.mxu0 0
    %311 = vmatpush1.bf16.msra.mxu0 %v288
    %312 = vmatprep.subr.bf16.mxu0 0
    %313 = vmatpush1.bf16.msra.mxu0 %v289
    %314 = vmatprep.subr.bf16.mxu0 0
    %315 = vmatpush1.bf16.msra.mxu0 0
    %316 = vmatprep.subr.bf16.mxu0 0
    %317 = vmatpush1.bf16.msra.mxu0 0
    %318 = vmatprep.subr.bf16.mxu0 0
    %319 = vmatpush1.bf16.msra.mxu0 0
    %320 = vmatprep.subr.bf16.mxu0 0
    %321 = vmatpush1.bf16.msra.mxu0 0
    %322 = vmatprep.subr.bf16.mxu0 0
    %323 = vmatpush1.bf16.msra.mxu0 0
    %324 = vmatprep.subr.bf16.mxu0 0
    %325 = vmatpush1.bf16.msra.mxu0 0
    %326 = vmatprep.subr.bf16.mxu0 0
    %327 = vmatpush1.bf16.msra.mxu0 0
    %328 = vmatprep.subr.bf16.mxu0 0
    %329 = vmatpush1.bf16.msra.mxu0 0
    %330 = vmatprep.mubr.bf16.mxu0 0
    %331 = vmatmul.mubr.bf16.gmra.mrb[0].mxu0 %v226
    %v332 = vpop.f32.mrb[0].mxu0
    %v333 = vadd.f32 %v248, %v332
    %v334 = vpop.f32.mrb[0].mxu0
    %v335 = vpop.f32.mrb[0].mxu0
    %v336 = vadd.f32 %v248, %v335
    %v337 = vpop.f32.mrb[0].mxu0
    %338 = vdwg.mxu0
    %v339 = vmax.f32 %v333, 0.0
    %v340 = vmax.f32 %v336, 0.0
    %v341 = vpack.c.bf16 %v340, %v339
    %v342 = vld [vmem:[%s5] sm:$0xf]
    %v343 = vld [vmem:[%s5 + $0x4] sm:$0xf]
    %v344 = vld [vmem:[%s5 + $0x8] sm:$0xf]
    %v345 = vld [vmem:[%s5 + $0xc] sm:$0xf]
    %v346 = vld [vmem:[%s5 + $0x10] sm:$0xf]
    %v347 = vld [vmem:[%s5 + $0x14] sm:$0xf]
    %v348 = vld [vmem:[%s5 + $0x18] sm:$0xf]
    %v349 = vld [vmem:[%s5 + $0x1c] sm:$0xf]
    %v350 = vld [vmem:[%s5 + $0x20] sm:$0xf]
    %v351 = vld [vmem:[%s5 + $0x24] sm:$0xf]
    %v352 = vld [vmem:[%s5 + $0x28] sm:$0xf]
    %v353 = vld [vmem:[%s5 + $0x2c] sm:$0xf]
    %v354 = vld [vmem:[%s5 + $0x30] sm:$0xf]
    %v355 = vld [vmem:[%s5 + $0x34] sm:$0xf]
    %v356 = vld [vmem:[%s5 + $0x38] sm:$0xf]
    %v357 = vld [vmem:[%s5 + $0x3c] sm:$0xf]
    %v358 = vld [vmem:[%s6] sm:$0x1]
    %v360 = vlaneseq
    %v361 = vshrl.u32 %v360, 7
    %v362 = vsub.s32 0, %v361
    %v363 = vrot.slane %v358, %v362
    %v381 = vunpack.c.l.b16 %v342
    %v382 = vunpack.c.l.b16 %v343
    %v383 = vunpack.c.l.b16 %v344
    %v384 = vunpack.c.l.b16 %v345
    %v385 = vunpack.c.l.b16 %v346
    %v386 = vunpack.c.l.b16 %v347
    %v387 = vunpack.c.l.b16 %v348
    %v388 = vunpack.c.l.b16 %v349
    %v389 = vunpack.c.l.b16 %v350
    %v390 = vunpack.c.l.b16 %v351
    %v391 = vunpack.c.l.b16 %v352
    %v392 = vunpack.c.l.b16 %v353
    %v393 = vunpack.c.l.b16 %v354
    %v394 = vunpack.c.l.b16 %v355
    %v395 = vunpack.c.l.b16 %v356
    %v396 = vunpack.c.l.b16 %v357
    %v397 = vpack.c.b16 %v382, %v381
    %v398 = vpack.c.b16 %v384, %v383
    %v399 = vpack.c.b16 %v386, %v385
    %v400 = vpack.c.b16 %v388, %v387
    %v401 = vpack.c.b16 %v390, %v389
    %v402 = vpack.c.b16 %v392, %v391
    %v403 = vpack.c.b16 %v394, %v393
    %v404 = vpack.c.b16 %v396, %v395
    %413 = vmatprep.subr.bf16.mxu0 0
    %414 = vmatpush1.bf16.msra.mxu0 %v397
    %415 = vmatprep.subr.bf16.mxu0 0
    %416 = vmatpush1.bf16.msra.mxu0 %v398
    %417 = vmatprep.subr.bf16.mxu0 0
    %418 = vmatpush1.bf16.msra.mxu0 %v399
    %419 = vmatprep.subr.bf16.mxu0 0
    %420 = vmatpush1.bf16.msra.mxu0 %v400
    %421 = vmatprep.subr.bf16.mxu0 0
    %422 = vmatpush1.bf16.msra.mxu0 %v401
    %423 = vmatprep.subr.bf16.mxu0 0
    %424 = vmatpush1.bf16.msra.mxu0 %v402
    %425 = vmatprep.subr.bf16.mxu0 0
    %426 = vmatpush1.bf16.msra.mxu0 %v403
    %427 = vmatprep.subr.bf16.mxu0 0
    %428 = vmatpush1.bf16.msra.mxu0 %v404
    %429 = vmatprep.subr.bf16.mxu0 0
    %430 = vmatpush1.bf16.msra.mxu0 0
    %431 = vmatprep.subr.bf16.mxu0 0
    %432 = vmatpush1.bf16.msra.mxu0 0
    %433 = vmatprep.subr.bf16.mxu0 0
    %434 = vmatpush1.bf16.msra.mxu0 0
    %435 = vmatprep.subr.bf16.mxu0 0
    %436 = vmatpush1.bf16.msra.mxu0 0
    %437 = vmatprep.subr.bf16.mxu0 0
    %438 = vmatpush1.bf16.msra.mxu0 0
    %439 = vmatprep.subr.bf16.mxu0 0
    %440 = vmatpush1.bf16.msra.mxu0 0
    %441 = vmatprep.subr.bf16.mxu0 0
    %442 = vmatpush1.bf16.msra.mxu0 0
    %443 = vmatprep.subr.bf16.mxu0 0
    %444 = vmatpush1.bf16.msra.mxu0 0
    %445 = vmatprep.mubr.bf16.mxu0 0
    %446 = vmatmul.mubr.bf16.gmra.mrb[0].mxu0 %v341
    %v447 = vpop.f32.mrb[0].mxu0
    %v448 = vadd.f32 %v363, %v447
    %v449 = vpop.f32.mrb[0].mxu0
    %v450 = vpop.f32.mrb[0].mxu0
    %v451 = vadd.f32 %v363, %v450
    %v452 = vpop.f32.mrb[0].mxu0
    %453 = vdwg.mxu0
    %vm454 = vcmask 523264
    %455 = vst.msk [vmem:[#allocation5] sm:$0xff] %vm454, %v448
    %456 = vst.msk [vmem:[#allocation5 + $0x8] sm:$0xff] %vm454, %v451
    // Predicated region
    $region34: #{_feature_align_net_impl.1} parent=1 // pred_check
      _
    $region35: #{_feature_align_net_impl.1} parent=1 // pred_check_branch
      %458 = sbr.rel (0) target = $region37
    $region36: #{_feature_align_net_impl.1} parent=1 // pred_region
      %s460 = ssub.s32 256, 256
      %461 = vsyncadd [#allocation4], %s460
      %s462 = sshll.u32 [#allocation5], 4
      %s463 = int_to_ptr.vmem [resolvable:$true] %s462
      %468 = dma.vmem_to_hbm [thread:$0]  %s463, 256, %s7, [#allocation4], 128, 128, 8
    $region37: #{_feature_align_net_impl.1} parent=1 // pred_fallthru
      _
    // Predicated region
    $region38: #{_feature_align_net_impl.1} parent=1 // pred_check
      _
    $region39: #{_feature_align_net_impl.1} parent=1 // pred_check_branch
      %470 = sbr.rel (0) target = $region41
    $region40: #{_feature_align_net_impl.1} parent=1 // pred_region
      %471 = dma.done [#allocation4], 256
    $region41: #{_feature_align_net_impl.1} parent=1 // pred_fallthru
      _
    %472 = vsyncpa [#allocation3], 1
    %473 = vsyncpa [#allocation4], 1

</llo_original>
